<compile_context>
chip_gen: v5e
topology: v5e:2x2
jax: 0.10.0
libtpu: 0.0.40
codegen_flags: <defaults>
</compile_context>

<pallas_src>
import functools

import jax
import jax.numpy as jnp
from jax.experimental import pallas as pl
from jax.experimental.pallas import tpu as pltpu

CPAD = 8               # pad class dim 5 -> 8 (one sublane group; full-dim block)
_DEFAULT_TILE = 8192   # batch tile rows; amortizes ~0.35us/step grid overhead


def _round_up(n, m):
    return ((n + m - 1) // m) * m


def _pick_tile(batch, tile_rows):
    # Keep >=4 grid steps for large batches (v7x: 2 TCs x >=2 steps each for
    # DMA/compute overlap), never below one 8-row sublane tile.
    quarter = _round_up(-(-batch // 4), 8)
    return max(8, min(_round_up(tile_rows, 8), quarter))


# ---------------------------------------------------------------------------
# Parameter preparation (hoisted out of the per-call hot path; run once).
# ---------------------------------------------------------------------------
def prepare_params(w, b):
    """w: (C, D) as in nn.Linear; returns lane-padded, pre-transposed params."""
    C, D = w.shape
    wt_pad = jnp.zeros((D, CPAD), w.dtype).at[:, :C].set(w.T)
    b_pad = jnp.zeros((1, CPAD), b.dtype).at[:, :C].set(b.reshape(1, C))
    return {"wt": wt_pad, "b": b_pad, "num_classes": C}


# ---------------------------------------------------------------------------
# Kernel 1: inference branch  ->  sigmoid(x @ W_T + b)
# ---------------------------------------------------------------------------
def _linear_sigmoid_kernel(x_ref, wt_ref, b_ref, o_ref):
    logits = jnp.dot(x_ref[...], wt_ref[...], preferred_element_type=jnp.float32)
    logits = logits + b_ref[...]                       # (TB, CPAD)
    o_ref[...] = jax.nn.sigmoid(logits).astype(o_ref.dtype)


def linear_sigmoid(x, params, *, tile_rows=_DEFAULT_TILE):
    B, D = x.shape
    C = params["num_classes"]
    TB = _pick_tile(B, tile_rows)
    n_tiles = pl.cdiv(B, TB)      # ragged last block handled by Pallas writeback mask

    out = pl.pallas_call(
        _linear_sigmoid_kernel,
        out_shape=jax.ShapeDtypeStruct((B, CPAD), jnp.float32),
        grid_spec=pltpu.PrefetchScalarGridSpec(
            num_scalar_prefetch=0,
            grid=(n_tiles,),
            in_specs=[
                pl.BlockSpec((TB, D), lambda i: (i, 0)),        # streamed per tile
                pl.BlockSpec((D, CPAD), lambda i: (0, 0)),      # VMEM-resident
                pl.BlockSpec((1, CPAD), lambda i: (0, 0)),      # VMEM-resident
            ],
            out_specs=pl.BlockSpec((TB, CPAD), lambda i: (i, 0)),
        ),
        compiler_params=pltpu.CompilerParams(
            dimension_semantics=("parallel",)),
        cost_estimate=pl.CostEstimate(
            flops=2 * B * D * CPAD,
            transcendentals=B * CPAD,
            bytes_accessed=4 * (B * D + D * CPAD + CPAD + B * CPAD)),
    )(x, params["wt"], params["b"])
    return out[:, :C]


# ---------------------------------------------------------------------------
# Kernel 2: training branch  ->  mean cross_entropy(x @ W_T + b, y)
#           (per-tile partial sums; final O(n_tiles) mean done in XLA so the
#            batch grid axis stays "parallel")
# ---------------------------------------------------------------------------
def _linear_ce_kernel(x_ref, wt_ref, b_ref, y_ref, o_ref, *, num_classes, batch_size):
    i = pl.program_id(0)
    logits = jnp.dot(x_ref[...], wt_ref[...], preferred_element_type=jnp.float32)
    logits = logits + b_ref[...]                       # (TB, CPAD)
    TB, CP = logits.shape

    col = jax.lax.broadcasted_iota(jnp.int32, (TB, CP), 1)
    masked = jnp.where(col < num_classes, logits, jnp.float32(-1e30))  # kill pad lanes
    m = jnp.max(masked, axis=-1, keepdims=True)
    lse = m + jnp.log(jnp.sum(jnp.exp(masked - m), axis=-1, keepdims=True))

    one_hot = (col == y_ref[...]).astype(jnp.float32)  # y_ref is (TB, 1) int32
    picked = jnp.sum(logits * one_hot, axis=-1, keepdims=True)
    per_row = lse - picked                             # (TB, 1)

    # Mask rows past the real batch (ragged last block reads undefined data).
    row = i * TB + jax.lax.broadcasted_iota(jnp.int32, (TB, 1), 0)
    per_row = jnp.where(row < batch_size, per_row, 0.0)

    tile_sum = jnp.sum(per_row)
    # Lane-dense (1, 8, 128) partial-sum block; one unmasked store per tile (tiny).
    o_ref[...] = tile_sum + jnp.zeros(o_ref.shape, o_ref.dtype)


def linear_cross_entropy(x, params, y, *, tile_rows=_DEFAULT_TILE):
    B, D = x.shape
    C = params["num_classes"]
    TB = _pick_tile(B, tile_rows)
    n_tiles = pl.cdiv(B, TB)
    y2 = y.astype(jnp.int32).reshape(B, 1)

    partial = pl.pallas_call(
        functools.partial(_linear_ce_kernel, num_classes=C, batch_size=B),
        out_shape=jax.ShapeDtypeStruct((n_tiles, 8, 128), jnp.float32),
        grid_spec=pltpu.PrefetchScalarGridSpec(
            num_scalar_prefetch=0,
            grid=(n_tiles,),
            in_specs=[
                pl.BlockSpec((TB, D), lambda i: (i, 0)),        # streamed per tile
                pl.BlockSpec((D, CPAD), lambda i: (0, 0)),      # VMEM-resident
                pl.BlockSpec((1, CPAD), lambda i: (0, 0)),      # VMEM-resident
                pl.BlockSpec((TB, 1), lambda i: (i, 0)),        # per-tile targets
            ],
            out_specs=pl.BlockSpec((1, 8, 128), lambda i: (i, 0, 0)),
        ),
        compiler_params=pltpu.CompilerParams(
            dimension_semantics=("parallel",)),
        cost_estimate=pl.CostEstimate(
            flops=2 * B * D * CPAD,
            transcendentals=B * CPAD,
            bytes_accessed=4 * (B * D + D * CPAD + CPAD + B + n_tiles * 8 * 128)),
    )(x, params["wt"], params["b"], y2)

    return jnp.sum(partial[:, 0, 0]) / B


# ---------------------------------------------------------------------------
# TorchModel.forward equivalent
# ---------------------------------------------------------------------------
def torch_model_forward(params, x, y=None):
    if y is not None:
        return linear_cross_entropy(x, params, y)
    return linear_sigmoid(x, params)


if __name__ == "__main__":
    input_size = 32
    num_classes = 5
    batch = 20   # deliberately not a multiple of 8 to exercise ragged-block masking

    key = jax.random.PRNGKey(0)
    kx, kw, kb, ky = jax.random.split(key, 4)

    # Deterministic parameter init (same shapes as nn.Linear(input_size, 5)).
    bound = 1.0 / (input_size ** 0.5)
    w = jax.random.uniform(kw, (num_classes, input_size), jnp.float32,
                           minval=-bound, maxval=bound)
    b = jax.random.uniform(kb, (num_classes,), jnp.float32,
                           minval=-bound, maxval=bound)
    params = prepare_params(w, b)

    x = jax.random.normal(kx, (batch, input_size), jnp.float32)
    y = jax.random.randint(ky, (batch,), 0, num_classes, jnp.int32)

    # Pure-JAX reference.
    logits_ref = x @ w.T + b
    probs_ref = jax.nn.sigmoid(logits_ref)
    lse_ref = jax.scipy.special.logsumexp(logits_ref, axis=-1)
    loss_ref = jnp.mean(lse_ref - logits_ref[jnp.arange(batch), y])

    # Inference branch: sigmoid(linear(x))  (default tile sizing)
    probs = torch_model_forward(params, x)
    jax.block_until_ready(probs)
    assert probs.shape == (batch, num_classes)
    assert jnp.allclose(probs, probs_ref, atol=1e-5), "sigmoid branch mismatch"

    # Training branch: cross_entropy(linear(x), y)  (default tile sizing)
    loss = torch_model_forward(params, x, y)
    jax.block_until_ready(loss)
    assert jnp.allclose(loss, loss_ref, atol=1e-5), "cross-entropy branch mismatch"

    # Explicit small-tile path: exercises the batch grid with a ragged last block,
    # VMEM-resident weights, row masking and the per-tile partial-sum reduction.
    probs_mt = linear_sigmoid(x, params, tile_rows=8)
    loss_mt = linear_cross_entropy(x, params, y, tile_rows=8)
    jax.block_until_ready((probs_mt, loss_mt))
    assert jnp.allclose(probs_mt, probs_ref, atol=1e-5), "multi-tile sigmoid mismatch"
    assert jnp.allclose(loss_mt, loss_ref, atol=1e-5), "multi-tile cross-entropy mismatch"

    print("KERNEL_OK")
</pallas_src>

<mosaic_0001>
module attributes {stable_mosaic.version = 11 : i64} {
  func.func @_linear_sigmoid_kernel(%arg0: i32, %arg1: memref<8x32xf32, #tpu.memory_space<vmem>>, %arg2: memref<32x8xf32, #tpu.memory_space<vmem>>, %arg3: memref<1x8xf32, #tpu.memory_space<vmem>>, %arg4: memref<8x8xf32, #tpu.memory_space<vmem>>) attributes {dimension_semantics = [#tpu.dimension_semantics<parallel>], iteration_bounds = array<i64: 3>, scalar_prefetch = 0 : i64, scratch_operands = 0 : i64, tpu.core_type = #tpu.core_type<tc>, window_params = [{transform_indices = @transform_0, window_bounds = array<i64: 8, 32>}, {pipeline_mode = #tpu.pipeline_mode<synchronous>, transform_indices = @transform_1, window_bounds = array<i64: 32, 8>}, {pipeline_mode = #tpu.pipeline_mode<synchronous>, transform_indices = @transform_2, window_bounds = array<i64: 1, 8>}, {transform_indices = @transform_3, window_bounds = array<i64: 8, 8>}]} {
    %c0 = arith.constant 0 : index
    %c0_0 = arith.constant 0 : index
    %0 = vector.load %arg1[%c0, %c0_0] : memref<8x32xf32, #tpu.memory_space<vmem>>, vector<8x32xf32>
    %c0_1 = arith.constant 0 : index
    %c0_2 = arith.constant 0 : index
    %1 = vector.load %arg2[%c0_1, %c0_2] : memref<32x8xf32, #tpu.memory_space<vmem>>, vector<32x8xf32>
    %cst = arith.constant dense<0.000000e+00> : vector<8x8xf32>
    %2 = tpu.matmul %0, %1, %cst {dimension_numbers = #tpu.dot_dimension_numbers<[1], [0], [0], [1], [0, 0, 1, 1], [], []>} : vector<8x32xf32>, vector<32x8xf32>, vector<8x8xf32> -> vector<8x8xf32>
    %c0_3 = arith.constant 0 : index
    %c0_4 = arith.constant 0 : index
    %3 = vector.load %arg3[%c0_3, %c0_4] : memref<1x8xf32, #tpu.memory_space<vmem>>, vector<1x8xf32>
    %4 = vector.broadcast %3 : vector<1x8xf32> to vector<8x8xf32>
    %5 = arith.addf %2, %4 : vector<8x8xf32>
    %6 = arith.negf %5 : vector<8x8xf32>
    %7 = math.exp %6 : vector<8x8xf32>
    %cst_5 = arith.constant 1.000000e+00 : f32
    %8 = vector.broadcast %cst_5 : f32 to vector<8x8xf32>
    %9 = arith.addf %8, %7 : vector<8x8xf32>
    %10 = arith.divf %8, %9 : vector<8x8xf32>
    %c0_6 = arith.constant 0 : index
    %c0_7 = arith.constant 0 : index
    %11 = vector.load %arg4[%c0_6, %c0_7] : memref<8x8xf32, #tpu.memory_space<vmem>>, vector<8x8xf32>
    tpu.vector_store %arg4[%c0_6, %c0_7], %10 {strides = array<i32>} : memref<8x8xf32, #tpu.memory_space<vmem>>, vector<8x8xf32>,
    return
  }
  func.func @transform_0(%arg0: i32) -> (i32, i32) {
    %c0_i32 = arith.constant 0 : i32
    %c0_i32_0 = arith.constant 0 : i32
    return %arg0, %c0_i32 : i32, i32
  }
  func.func @transform_1(%arg0: i32) -> (i32, i32) {
    %c0_i32 = arith.constant 0 : i32
    %c0_i32_0 = arith.constant 0 : i32
    %c0_i32_1 = arith.constant 0 : i32
    return %c0_i32, %c0_i32_0 : i32, i32
  }
  func.func @transform_2(%arg0: i32) -> (i32, i32) {
    %c0_i32 = arith.constant 0 : i32
    %c0_i32_0 = arith.constant 0 : i32
    %c0_i32_1 = arith.constant 0 : i32
    return %c0_i32, %c0_i32_0 : i32, i32
  }
  func.func @transform_3(%arg0: i32) -> (i32, i32) {
    %c0_i32 = arith.constant 0 : i32
    %c0_i32_0 = arith.constant 0 : i32
    return %arg0, %c0_i32 : i32, i32
  }
}

</mosaic_0001>

<llo_original>
// kernel: tpu_custom_call.1
$region0: #{tpu_custom_call.1}
  #allocation0 [shape = 'u32[]', space=smem, size = 0x4, offset = 0x4, fixed_abs, tag = 'smem constant byte address 0x4 - core index']
  #allocation1 [shape = 'u32[72,128]{1,0:T(1,128)}', space=vmem, size = 0x9000, scoped, tag = 'internal scratch']
  %s0 = inlined_call_operand.vmem [shape: f32[20,32], index: 0, kind: input, shape index: {}]
  %s1 = inlined_call_operand.vmem [shape: f32[32,8], index: 1, kind: input, shape index: {}]
  %s2 = inlined_call_operand.vmem [shape: f32[1,8], index: 2, kind: input, shape index: {}]
  %s3 = inlined_call_operand.vmem [shape: f32[20,8], index: 3, kind: output, shape index: {}]
  %s4 = sld [smem:[#allocation0]]
  $region45: #{tpu_custom_call.1} parent=0
    _
  %s6 = ssub.s32 1, %s4
  %s7 = scalar_select 0, %s6, %s4
  loop: start=0, step=1, limit=5
  $region2: #{tpu_custom_call.1} parent=0 // loop_pre_header
    _
  $region3: #{tpu_custom_call.1} parent=0 // loop_header
    %s9 = sphi 0, %s13
    %p10 = scmp.ge.s32.totalorder %s9, 5
    %s19 = sphi 0, %s21
    %s22 = sphi 0, %s19
    %s23 = sphi 0, %s22
    %s39 = sphi 0, %s23
    %s43 = sphi 0, %s43
    %s45 = sphi 0, %s43
    %s46 = sphi 0, %s45
    %s60 = sphi 0, %s46
    %s64 = sphi 0, %s64
    %s66 = sphi 0, %s64
    %s67 = sphi 0, %s66
    %s81 = sphi 0, %s67
    %s87 = sphi 0, %s89
    %s90 = sphi 0, %s87
    %s91 = sphi 0, %s90
    %s107 = sphi 0, %s91
  $region4: #{tpu_custom_call.1} parent=0 // loop_header_branch
    %12 = sbr.rel (%p10) target = $region8
  $region5: #{tpu_custom_call.1} parent=0 // loop_body
    %s14 = ssub.s32 %s9, 1
    %s15 = ssub.s32 %s9, 2
    %s16 = sadd.s32 %s9, 1
    %s17 = ssub.s32 %s9, %s16
    %p18 = scmp.eq.s32.totalorder %s17, 0
    %s20 = sadd.s32 %s19, 1
    %s21 = scalar_select %p18, %s19, %s20
    %p24 = pneg %p18
    %p25 = scmp.eq.s32.totalorder %s9, 2
    %p26 = por %p24, %p25
    %p27 = scmp.ne.s32.totalorder %s19, %s22
    %p28 = scmp.eq.s32.totalorder %s9, 0
    %p29 = por %p27, %p28
    %p30 = scmp.ne.s32.totalorder %s19, %s22
    %p31 = scmp.eq.s32.totalorder %s14, 2
    %p32 = por %p30, %p31
    %p33 = scmp.ne.s32.totalorder %s22, %s23
    %p34 = scmp.eq.s32.totalorder %s14, 0
    %p35 = por %p33, %p34
    %p36 = scmp.ne.s32.totalorder %s22, %s23
    %p37 = scmp.eq.s32.totalorder %s15, 2
    %p38 = por %p36, %p37
    %p40 = scmp.ne.s32.totalorder %s23, %s39
    %p41 = scmp.eq.s32.totalorder %s15, 0
    %p42 = por %p40, %p41
    %s44 = sadd.s32 %s43, 1
    %p47 = scmp.eq.s32.totalorder %s9, 2
    %p48 = scmp.ne.s32.totalorder %s43, %s45
    %p49 = scmp.eq.s32.totalorder %s9, 0
    %p50 = por %p48, %p49
    %p51 = scmp.ne.s32.totalorder %s43, %s45
    %p52 = scmp.eq.s32.totalorder %s14, 2
    %p53 = por %p51, %p52
    %p54 = scmp.ne.s32.totalorder %s45, %s46
    %p55 = scmp.eq.s32.totalorder %s14, 0
    %p56 = por %p54, %p55
    %p57 = scmp.ne.s32.totalorder %s45, %s46
    %p58 = scmp.eq.s32.totalorder %s15, 2
    %p59 = por %p57, %p58
    %p61 = scmp.ne.s32.totalorder %s46, %s60
    %p62 = scmp.eq.s32.totalorder %s15, 0
    %p63 = por %p61, %p62
    %s65 = sadd.s32 %s64, 1
    %p68 = scmp.eq.s32.totalorder %s9, 2
    %p69 = scmp.ne.s32.totalorder %s64, %s66
    %p70 = scmp.eq.s32.totalorder %s9, 0
    %p71 = por %p69, %p70
    %p72 = scmp.ne.s32.totalorder %s64, %s66
    %p73 = scmp.eq.s32.totalorder %s14, 2
    %p74 = por %p72, %p73
    %p75 = scmp.ne.s32.totalorder %s66, %s67
    %p76 = scmp.eq.s32.totalorder %s14, 0
    %p77 = por %p75, %p76
    %p78 = scmp.ne.s32.totalorder %s66, %s67
    %p79 = scmp.eq.s32.totalorder %s15, 2
    %p80 = por %p78, %p79
    %p82 = scmp.ne.s32.totalorder %s67, %s81
    %p83 = scmp.eq.s32.totalorder %s15, 0
    %p84 = por %p82, %p83
    %s85 = ssub.s32 %s9, %s16
    %p86 = scmp.eq.s32.totalorder %s85, 0
    %s88 = sadd.s32 %s87, 1
    %s89 = scalar_select %p86, %s87, %s88
    %p92 = pneg %p86
    %p93 = scmp.eq.s32.totalorder %s9, 2
    %p94 = por %p92, %p93
    %p95 = scmp.ne.s32.totalorder %s87, %s90
    %p96 = scmp.eq.s32.totalorder %s9, 0
    %p97 = por %p95, %p96
    %p98 = scmp.ne.s32.totalorder %s87, %s90
    %p99 = scmp.eq.s32.totalorder %s14, 2
    %p100 = por %p98, %p99
    %p101 = scmp.ne.s32.totalorder %s90, %s91
    %p102 = scmp.eq.s32.totalorder %s14, 0
    %p103 = por %p101, %p102
    %p104 = scmp.ne.s32.totalorder %s90, %s91
    %p105 = scmp.eq.s32.totalorder %s15, 2
    %p106 = por %p104, %p105
    %p108 = scmp.ne.s32.totalorder %s91, %s107
    %p109 = scmp.eq.s32.totalorder %s15, 0
    %p110 = por %p108, %p109
    %p111 = scmp.le.s32.totalorder 1, %s9
    %p112 = scmp.lt.s32.totalorder %s9, 4
    %p113 = pnand %p111, %p112
    %p114 = pneg %p113
    // Predicated region
    $region9: #{tpu_custom_call.1} parent=5 // pred_check
      _
    $region10: #{tpu_custom_call.1} parent=5 // pred_check_branch
      %116 = sbr.rel (%p113) target = $region12
    $region11: #{tpu_custom_call.1} parent=5 // pred_region
      %s117 = ssub.s32 %s9, 1
      // Predicated region
      $region13: #{tpu_custom_call.1} parent=11 // pred_check
        %p118 = pneg %p56
      $region14: #{tpu_custom_call.1} parent=11 // pred_check_branch
        %120 = sbr.rel (%p118) target = $region16
      $region15: #{tpu_custom_call.1} parent=11 // pred_region
        _
      $region16: #{tpu_custom_call.1} parent=11 // pred_fallthru
        _
      // Predicated region
      $region17: #{tpu_custom_call.1} parent=11 // pred_check
        %p121 = pneg %p77
      $region18: #{tpu_custom_call.1} parent=11 // pred_check_branch
        %123 = sbr.rel (%p121) target = $region20
      $region19: #{tpu_custom_call.1} parent=11 // pred_region
        _
      $region20: #{tpu_custom_call.1} parent=11 // pred_fallthru
        _
    $region12: #{tpu_custom_call.1} parent=5 // pred_fallthru
      _
    %p124 = scmp.lt.s32.totalorder %s9, 3
    // Predicated region
    $region21: #{tpu_custom_call.1} parent=5 // pred_check
      %p125 = pneg %p124
    $region22: #{tpu_custom_call.1} parent=5 // pred_check_branch
      %127 = sbr.rel (%p125) target = $region24
    $region23: #{tpu_custom_call.1} parent=5 // pred_region
      // Predicated region
      $region25: #{tpu_custom_call.1} parent=23 // pred_check
        %p128 = pneg %p29
      $region26: #{tpu_custom_call.1} parent=23 // pred_check_branch
        %130 = sbr.rel (%p128) target = $region28
      $region27: #{tpu_custom_call.1} parent=23 // pred_region
        %p131 = scmp.lt.s32.totalorder %s9, 2
        %s132 = scalar_select %p131, %s9, 2
        %s133 = smul.addr %s132, 8
        %s134 = scalar_lea.vmem %s0, %s133
      $region28: #{tpu_custom_call.1} parent=23 // pred_fallthru
        _
    $region24: #{tpu_custom_call.1} parent=5 // pred_fallthru
      _
    %p135 = scmp.le.s32.totalorder 1, %s9
    %p136 = scmp.lt.s32.totalorder %s9, 4
    %p137 = pnand %p135, %p136
    %p138 = pneg %p137
    // Predicated region
    $region29: #{tpu_custom_call.1} parent=5 // pred_check
      _
    $region30: #{tpu_custom_call.1} parent=5 // pred_check_branch
      %140 = sbr.rel (%p137) target = $region32
    $region31: #{tpu_custom_call.1} parent=5 // pred_region
      %s141 = ssub.s32 %s9, 1
      %p142 = scmp.lt.s32.totalorder %s14, 2
      %s143 = scalar_select %p142, %s14, 2
      %s144 = smul.addr %s143, 8
      %s145 = scalar_lea.vmem %s0, %s144
      %p146 = pneg %p35
      %p147 = pneg %p32
      %p148 = pneg %p56
      %p149 = pneg %p53
      %p150 = pneg %p77
      %p151 = pneg %p74
      %p152 = pneg %p103
      %p153 = pneg %p100
      %p154 = scmp.lt.s32.totalorder %s14, 2
      %s155 = scalar_select %p154, %s14, 2
      %s156 = smul.addr %s155, 8
      %s157 = scalar_lea.vmem %s3, %s156
      %p158 = scmp.lt.s32.totalorder %s14, 2
      %s159 = scalar_select %p158, %s14, 2
      %s160 = smul.addr %s159, 8
      %s161 = scalar_lea.vmem %s0, %s160
      %p162 = scmp.lt.s32.totalorder %s14, 2
      %s163 = scalar_select %p162, %s14, 2
      %s164 = smul.addr %s163, 8
      %s165 = scalar_lea.vmem %s3, %s164
      %v166 = vld [vmem:[%s161] sm:$0xff]
      %v167 = vld [vmem:[%s1] sm:$0xff]
      %v168 = vld [vmem:[%s1 + $0x8] sm:$0xff]
      %v169 = vld [vmem:[%s1 + $0x10] sm:$0xff]
      %v170 = vld [vmem:[%s1 + $0x18] sm:$0xff]
      %v171 = vld [vmem:[%s2] sm:$0x1]
      %v173 = vperm.slane %v171, 0
      %vm175 = vcmask 261120
      %v177 = vsel %vm175, %v166, 0
      %179 = vmatpush.msra.mxu0 0.0
      %180 = vmatpush.msra.mxu0 0.0
      %181 = vmatpush.msra.mxu0 0.0
      %182 = vmatpush.msra.mxu0 0.0
      %183 = vmatpush.msra.mxu0 0.0
      %184 = vmatpush.msra.mxu0 0.0
      %185 = vmatpush.msra.mxu0 0.0
      %186 = vmatpush.msra.mxu0 0.0
      %187 = vmatpush.msra.mxu0 0.0
      %188 = vmatpush.msra.mxu0 0.0
      %189 = vmatpush.msra.mxu0 0.0
      %190 = vmatpush.msra.mxu0 0.0
      %191 = vmatpush.msra.mxu0 %v170
      %192 = vmatpush.msra.mxu0 %v169
      %193 = vmatpush.msra.mxu0 %v168
      %194 = vmatpush.msra.mxu0 %v167
      %195 = vmatmul.f32.gmra.mxu0 %v177
      %v196 = vpop.f32.mrf.mxu0
      %v197 = vadd.f32 %v173, %v196
      %198 = vdwg.mxu0
      %v199 = vxor.u32 %v197, 2147483648
      %v200 = vmul.f32 %v199, 1.442695
      %v201 = vpow.pop %v200
      %v202 = vadd.f32 %v201, 1.0
      %v203 = vrcp.pop %v202
      %v204 = vmul.f32 %v202, %v203
      %v205 = vsub.f32 1.0, %v204
      %v206 = vmul.f32 %v203, %v205
      %v207 = vadd.f32 %v203, %v206
      %vm208 = vweird.f32 %v202
      %vm209 = vweird.f32 %v203
      %vm210 = vmor %vm208, %vm209
      %v211 = vsel %vm210, %v203, %v207
      %v212 = vand.u32 2147483647, %v202
      %vm213 = vcmp.eq.f32.partialorder %v212, 8.507059e+37
      %v214 = vand.u32 %v202, 2147483648
      %v215 = vor.u32 1.1754944e-38, %v214
      %v216 = vsel %vm213, %v215, %v211
      %v217 = vmul.f32 1.0, %v216
      %vm218 = vcmask 64512
      %219 = vst.msk [vmem:[%s165] sm:$0xff] %vm218, %v217
      %p220 = scmp.lt.s32.totalorder %s14, 2
      %s221 = scalar_select %p220, %s14, 2
      %s222 = smul.addr %s221, 8
      %s223 = scalar_lea.vmem %s3, %s222
      // Predicated region
      $region33: #{tpu_custom_call.1} parent=31 // pred_check
        %p224 = pneg %p100
      $region34: #{tpu_custom_call.1} parent=31 // pred_check_branch
        %226 = sbr.rel (%p224) target = $region36
      $region35: #{tpu_custom_call.1} parent=31 // pred_region
        _
      $region36: #{tpu_custom_call.1} parent=31 // pred_fallthru
        _
    $region32: #{tpu_custom_call.1} parent=5 // pred_fallthru
      _
    %p227 = scmp.le.s32.totalorder 2, %s9
    // Predicated region
    $region37: #{tpu_custom_call.1} parent=5 // pred_check
      %p228 = pneg %p227
    $region38: #{tpu_custom_call.1} parent=5 // pred_check_branch
      %230 = sbr.rel (%p228) target = $region40
    $region39: #{tpu_custom_call.1} parent=5 // pred_region
      %s231 = ssub.s32 %s9, 2
      // Predicated region
      $region41: #{tpu_custom_call.1} parent=39 // pred_check
        %p232 = pneg %p106
      $region42: #{tpu_custom_call.1} parent=39 // pred_check_branch
        %234 = sbr.rel (%p232) target = $region44
      $region43: #{tpu_custom_call.1} parent=39 // pred_region
        %p235 = scmp.lt.s32.totalorder %s15, 2
        %s236 = scalar_select %p235, %s15, 2
        %s237 = smul.addr %s236, 8
        %s238 = scalar_lea.vmem %s3, %s237
      $region44: #{tpu_custom_call.1} parent=39 // pred_fallthru
        _
    $region40: #{tpu_custom_call.1} parent=5 // pred_fallthru
      _
  $region6: #{tpu_custom_call.1} parent=0 // loop_footer
    %s13 = sadd.s32 1, %s9
  $region7: #{tpu_custom_call.1} parent=0 // loop_footer_branch
    %8 = sbr.rel target = $region3
  $region8: #{tpu_custom_call.1} parent=0 // loop_exit
    _

</llo_original>
